<compile_context>
chip_gen: v7x
topology: tpu7x:2x2x1
jax: 0.10.0
libtpu: 0.0.40
codegen_flags: <defaults>
</compile_context>

<pallas_src>
import functools
import math

import jax
import jax.numpy as jnp
from jax import lax
from jax.experimental import pallas as pl
from jax.experimental.pallas import tpu as pltpu


# ---------------------------------------------------------------------------
# Kernels
# ---------------------------------------------------------------------------

def _superop_kernel(st_ref, x_ref, o_ref):
    """Y_flat = X_flat @ S^T : one lane-dense GEMM per grid step.

    st_ref: (D*D, O*O)  resident across the grid (constant index map)
    x_ref : (TB, D*D)
    o_ref : (TB, O*O)
    """
    o_ref[...] = jnp.dot(
        x_ref[...], st_ref[...], preferred_element_type=jnp.float32
    ).astype(o_ref.dtype)


def _general_kernel(w_ref, w2t_ref, x_ref, o_ref, u_ref, *, tb, rank, out_dim,
                    d_in):
    """Direct Kraus contraction for one batch tile.

    w_ref  : (R, O, D)    resident
    w2t_ref: (D, R*O)     resident;  w2t[e, r*O + p] = W[r, p, e]
    x_ref  : (TB*D, D)    batch tile with rows pre-flattened in the wrapper
    o_ref  : (TB, O, O)
    u_ref  : (TB*D, R*O)  f32 VMEM scratch
    """
    # First contraction for the whole tile in ONE matmul, weight stationary:
    #   U[b*D + d, r*O + p] = sum_e x[b, d, e] * W[r, p, e]
    u_ref[...] = jnp.dot(x_ref[...], w2t_ref[...],
                         preferred_element_type=jnp.float32)

    # Second contraction:  Y[b] = sum_r W[r] @ U_b[:, r*O:(r+1)*O]
    def body(b, carry):
        start = pl.multiple_of(b * d_in, d_in)
        u_b = u_ref[pl.ds(start, d_in), :]                       # (D, R*O)
        acc = jnp.dot(w_ref[0], u_b[:, 0:out_dim],
                      preferred_element_type=jnp.float32)        # (O, O)
        for r in range(1, rank):                                 # rank is small
            acc = acc + jnp.dot(w_ref[r],
                                u_b[:, r * out_dim:(r + 1) * out_dim],
                                preferred_element_type=jnp.float32)
        o_ref[b] = acc.astype(o_ref.dtype)
        return carry

    lax.fori_loop(0, tb, body, 0, unroll=(tb <= 4))


# ---------------------------------------------------------------------------
# Sizing helpers
# ---------------------------------------------------------------------------

def _physical_vmem_bytes():
    default = 128 * 1024 * 1024
    try:
        info = pltpu.get_tpu_info()
        return int(getattr(info, "vmem_capacity_bytes", default))
    except Exception:
        return default


def _choose_batch_tile(batch, bytes_per_b, resident_bytes, budget_bytes,
                       max_tb, min_tiles=8):
    """Largest tb that divides `batch`, fits the VMEM budget, stays sublane
    friendly (multiple of 8 or the full batch) and, when batch is large,
    leaves at least `min_tiles` grid steps (keeps both v7x TCs busy)."""
    avail = max(budget_bytes - resident_bytes, bytes_per_b)
    tb = max(1, int(avail // bytes_per_b))
    tb = min(tb, max_tb, batch)
    if batch >= min_tiles * 8:
        tb = min(tb, batch // min_tiles)
    while tb > 1 and (batch % tb != 0 or (tb % 8 != 0 and tb != batch)):
        tb -= 1
    return max(tb, 1)


# ---------------------------------------------------------------------------
# Wrapper
# ---------------------------------------------------------------------------

def kraus_forward(x, weight, *, tb=None, compute_dtype=None,
                  vmem_limit_bytes=None, force_general=False):
    """x: (B, D, D), weight: (R, O, D) -> (B, O, O).

    compute_dtype: optional matmul-input dtype (e.g. jnp.bfloat16 on v6e/v7x
      for native MXU rate and halved DMA bytes); accumulation stays f32.
    """
    B, D, D2 = x.shape
    assert D == D2, "x must be a batch of square matrices"
    R, O, Dw = weight.shape
    assert Dw == D

    out_dtype = x.dtype
    in_dtype = compute_dtype if compute_dtype is not None else x.dtype
    in_isz = jnp.dtype(in_dtype).itemsize
    out_isz = jnp.dtype(out_dtype).itemsize

    if vmem_limit_bytes is None:
        # ~75% of physical VMEM: ~96 MiB on v5e/v6e (128 MiB physical),
        # ~48 MiB on v7x (64 MiB physical) -- headroom for compiler scratch.
        vmem_limit_bytes = int(0.75 * _physical_vmem_bytes())
    budget = int(0.8 * vmem_limit_bytes)

    # ----- path selection ---------------------------------------------------
    st_bytes = (D * D) * (O * O) * in_isz            # resident superoperator
    flop_blowup = (D * O) / max(R * (D + O), 1)      # superop vs direct FLOPs
    use_superop = (not force_general
                   and st_bytes <= budget // 4
                   and flop_blowup <= 16.0)

    cparams = pltpu.CompilerParams(
        dimension_semantics=("parallel",),
        vmem_limit_bytes=int(vmem_limit_bytes),
    )

    if use_superop:
        # S^T[d*D+e, o*O+p] = sum_r W[r,o,d] * W[r,p,e]   (one-off, XLA side)
        w32 = weight.astype(jnp.float32)
        st = jnp.einsum("rod,rpe->deop", w32, w32).reshape(D * D, O * O)
        st = st.astype(in_dtype)
        x_flat = x.reshape(B, D * D).astype(in_dtype)

        per_b = 2 * (D * D) * in_isz + 2 * (O * O) * out_isz   # dbl-buffered
        if tb is None:
            tb = _choose_batch_tile(B, per_b, 2 * st_bytes, budget, max_tb=1024)
        assert B % tb == 0, "batch tile must divide the batch"

        grid_spec = pltpu.PrefetchScalarGridSpec(
            num_scalar_prefetch=0,
            grid=(B // tb,),
            in_specs=[
                # Constant index map -> S^T DMA'd once, resident for the grid.
                pl.BlockSpec((D * D, O * O), lambda i: (0, 0)),
                pl.BlockSpec((tb, D * D), lambda i: (i, 0)),
            ],
            out_specs=pl.BlockSpec((tb, O * O), lambda i: (i, 0)),
        )
        cost = pl.CostEstimate(
            flops=int(2 * B * (D * D) * (O * O)),
            transcendentals=0,
            bytes_accessed=int(x_flat.size * in_isz + st.size * in_isz
                               + B * O * O * out_isz),
        )
        y_flat = pl.pallas_call(
            _superop_kernel,
            out_shape=jax.ShapeDtypeStruct((B, O * O), out_dtype),
            grid_spec=grid_spec,
            compiler_params=cparams,
            cost_estimate=cost,
        )(st, x_flat)
        return y_flat.reshape(B, O, O)

    # ----- direct / large-shape path -----------------------------------------
    w_in = weight.astype(in_dtype)                        # (R, O, D)
    w2t = weight.reshape(R * O, D).T.astype(in_dtype)     # (D, R*O)
    x_rows = x.reshape(B * D, D).astype(in_dtype)         # rows flattened

    per_b = (2 * D * D * in_isz          # x tile, double-buffered
             + 2 * O * O * out_isz       # out tile, double-buffered
             + D * R * O * 4)            # f32 U scratch (single copy)
    resident = 2 * 2 * (R * O * D) * in_isz               # both weight copies
    if tb is None:
        tb = _choose_batch_tile(B, per_b, resident, budget,
                                max_tb=max(1, 4096 // D))
    assert B % tb == 0, "batch tile must divide the batch"

    kernel = functools.partial(_general_kernel, tb=tb, rank=R, out_dim=O,
                               d_in=D)
    grid_spec = pltpu.PrefetchScalarGridSpec(
        num_scalar_prefetch=0,
        grid=(B // tb,),
        in_specs=[
            pl.BlockSpec((R, O, D), lambda i: (0, 0, 0)),
            pl.BlockSpec((D, R * O), lambda i: (0, 0)),
            pl.BlockSpec((tb * D, D), lambda i: (i, 0)),
        ],
        out_specs=pl.BlockSpec((tb, O, O), lambda i: (i, 0, 0)),
        scratch_shapes=[pltpu.VMEM((tb * D, R * O), jnp.float32)],
    )
    cost = pl.CostEstimate(
        flops=int(2 * B * R * O * D * (D + O)),
        transcendentals=0,
        bytes_accessed=int(x_rows.size * in_isz
                           + (w_in.size + w2t.size) * in_isz
                           + B * O * O * out_isz),
    )
    return pl.pallas_call(
        kernel,
        out_shape=jax.ShapeDtypeStruct((B, O, O), out_dtype),
        grid_spec=grid_spec,
        compiler_params=cparams,
        cost_estimate=cost,
    )(w_in, w2t, x_rows)


def init_kraus_weight(key, rank, output_dim, d_in, dtype=jnp.float32):
    # Matches nn.init.kaiming_uniform_(w, a=sqrt(5)) for a (rank, O, D) tensor:
    # fan_in = size(1) * prod(size[2:]) = O * D; bound = 1/sqrt(fan_in).
    fan_in = output_dim * d_in
    bound = 1.0 / math.sqrt(fan_in)
    return jax.random.uniform(
        key, (rank, output_dim, d_in), dtype=dtype, minval=-bound, maxval=bound
    )


if __name__ == "__main__":
    B, D, O, R = 8, 32, 16, 3

    key = jax.random.PRNGKey(0)
    kx, kw = jax.random.split(key)
    x = jax.random.normal(kx, (B, D, D), dtype=jnp.float32)
    weight = init_kraus_weight(kw, R, O, D)

    # Reference: Y[b] = sum_r W[r] @ x[b] @ W[r]^T
    y_ref = jnp.einsum("rod,bde,rpe->bop", weight, x, weight)

    # Superoperator-GEMM path (auto-selected at these shapes).
    y = jax.block_until_ready(kraus_forward(x, weight))
    assert y.shape == (B, O, O)
    assert jnp.allclose(y, y_ref, atol=1e-3, rtol=1e-3)

    # Direct path (auto-selected for large D / O); exercised here as well.
    y2 = jax.block_until_ready(kraus_forward(x, weight, force_general=True))
    assert jnp.allclose(y2, y_ref, atol=1e-3, rtol=1e-3)

    print("KERNEL_OK")
</pallas_src>

<mosaic_0001>
module attributes {stable_mosaic.version = 11 : i64} {
  func.func @_superop_kernel(%arg0: i32, %arg1: memref<1024x256xf32, #tpu.memory_space<vmem>>, %arg2: memref<8x1024xf32, #tpu.memory_space<vmem>>, %arg3: memref<8x256xf32, #tpu.memory_space<vmem>>) attributes {dimension_semantics = [#tpu.dimension_semantics<parallel>], iteration_bounds = array<i64: 1>, scalar_prefetch = 0 : i64, scratch_operands = 0 : i64, tpu.core_type = #tpu.core_type<tc>, window_params = [{pipeline_mode = #tpu.pipeline_mode<synchronous>, transform_indices = @transform_0, window_bounds = array<i64: 1024, 256>}, {transform_indices = @transform_1, window_bounds = array<i64: 8, 1024>}, {transform_indices = @transform_2, window_bounds = array<i64: 8, 256>}]} {
    %c0 = arith.constant 0 : index
    %c0_0 = arith.constant 0 : index
    %0 = vector.load %arg2[%c0, %c0_0] : memref<8x1024xf32, #tpu.memory_space<vmem>>, vector<8x1024xf32>
    %c0_1 = arith.constant 0 : index
    %c0_2 = arith.constant 0 : index
    %1 = vector.load %arg1[%c0_1, %c0_2] : memref<1024x256xf32, #tpu.memory_space<vmem>>, vector<1024x256xf32>
    %cst = arith.constant dense<0.000000e+00> : vector<8x256xf32>
    %2 = tpu.matmul %0, %1, %cst {dimension_numbers = #tpu.dot_dimension_numbers<[1], [0], [0], [1], [0, 0, 1, 1], [], []>} : vector<8x1024xf32>, vector<1024x256xf32>, vector<8x256xf32> -> vector<8x256xf32>
    %c0_3 = arith.constant 0 : index
    %c0_4 = arith.constant 0 : index
    %3 = vector.load %arg3[%c0_3, %c0_4] : memref<8x256xf32, #tpu.memory_space<vmem>>, vector<8x256xf32>
    tpu.vector_store %arg3[%c0_3, %c0_4], %2 {strides = array<i32>} : memref<8x256xf32, #tpu.memory_space<vmem>>, vector<8x256xf32>,
    return
  }
  func.func @transform_0(%arg0: i32) -> (i32, i32) {
    %c0_i32 = arith.constant 0 : i32
    %c0_i32_0 = arith.constant 0 : i32
    %c0_i32_1 = arith.constant 0 : i32
    return %c0_i32, %c0_i32_0 : i32, i32
  }
  func.func @transform_1(%arg0: i32) -> (i32, i32) {
    %c0_i32 = arith.constant 0 : i32
    %c0_i32_0 = arith.constant 0 : i32
    return %arg0, %c0_i32 : i32, i32
  }
  func.func @transform_2(%arg0: i32) -> (i32, i32) {
    %c0_i32 = arith.constant 0 : i32
    %c0_i32_0 = arith.constant 0 : i32
    return %arg0, %c0_i32 : i32, i32
  }
}

</mosaic_0001>

<llo_original>
// kernel: tpu_custom_call.1
$region0: #{tpu_custom_call.1}
  #allocation0 [shape = 'u32[]', space=smem, size = 0x4, offset = 0x4, fixed_abs, tag = 'smem constant byte address 0x4 - core index']
  #allocation1 [shape = 'u32[144,128]{1,0:T(1,128)}', space=vmem, size = 0x12000, scoped, tag = 'internal scratch']
  %s0 = inlined_call_operand.hbm [shape: f32[1024,256], index: 0, kind: input, shape index: {}]
  %s1 = inlined_call_operand.hbm [shape: f32[8,1024], index: 1, kind: input, shape index: {}]
  %s2 = inlined_call_operand.hbm [shape: f32[8,256], index: 2, kind: output, shape index: {}]
  %s3 = sld [smem:[#allocation0]]
  $region26: #{tpu_custom_call.1} parent=0
    _
  %s5 = ssub.s32 1, %s3
  %s6 = scalar_select 0, %s5, %s3
  $region1: #{tpu_custom_call.1} parent=0
    #allocation2 [shape = 'u8[1048576]{0}', space=vmem, size = 0x100000, scoped, tag = 'input window, operand 0, single buffered']
    #allocation3 [shape = 's32[1]{0}', space=sflag, size = 0x4, scoped, tag = 'scoped memory for tpu_custom_call.1']
    #allocation4 [shape = 's32[1]{0}', space=sflag, size = 0x4, scoped, tag = 'scoped memory for tpu_custom_call.1']
    #allocation5 [shape = 'u8[32768]{0}', space=vmem, size = 0x8000, scoped, tag = 'input window, operand 1, single buffered']
    #allocation6 [shape = 's32[1]{0}', space=sflag, size = 0x4, scoped, tag = 'scoped memory for tpu_custom_call.1']
    #allocation7 [shape = 'u8[8192]{0}', space=vmem, size = 0x2000, scoped, tag = 'output window, operand 0, single buffered']
    %7 = vsyncpa [#allocation3], 0
    %8 = vsyncpa [#allocation6], 0
    %9 = vsyncpa [#allocation4], 0
    // Predicated region
    $region2: #{tpu_custom_call.1} parent=1 // pred_check
      _
    $region3: #{tpu_custom_call.1} parent=1 // pred_check_branch
      %11 = sbr.rel (0) target = $region5
    $region4: #{tpu_custom_call.1} parent=1 // pred_region
      %s13 = ssub.s32 32768, 32768
      %14 = vsyncadd [#allocation3], %s13
      %s15 = sshll.u32 [#allocation2], 4
      %s16 = int_to_ptr.vmem [resolvable:$true] %s15
      %21 = dma.hbm_to_vmem [thread:$0]  %s0, 32768, %s16, [#allocation3], 256, 256, 16
    $region5: #{tpu_custom_call.1} parent=1 // pred_fallthru
      _
    // Predicated region
    $region6: #{tpu_custom_call.1} parent=1 // pred_check
      _
    $region7: #{tpu_custom_call.1} parent=1 // pred_check_branch
      %23 = sbr.rel (0) target = $region9
    $region8: #{tpu_custom_call.1} parent=1 // pred_region
      %s25 = ssub.s32 1024, 1024
      %26 = vsyncadd [#allocation6], %s25
      %s28 = sshll.u32 [#allocation5], 4
      %s29 = int_to_ptr.vmem [resolvable:$true] %s28
      %31 = dma.hbm_to_vmem [thread:$0]  %s1, 1024, %s29, [#allocation6]
    $region9: #{tpu_custom_call.1} parent=1 // pred_fallthru
      _
    // Predicated region
    $region10: #{tpu_custom_call.1} parent=1 // pred_check
      _
    $region11: #{tpu_custom_call.1} parent=1 // pred_check_branch
      %33 = sbr.rel (0) target = $region13
    $region12: #{tpu_custom_call.1} parent=1 // pred_region
      %34 = dma.done [#allocation3], 32768
    $region13: #{tpu_custom_call.1} parent=1 // pred_fallthru
      _
    // Predicated region
    $region14: #{tpu_custom_call.1} parent=1 // pred_check
      _
    $region15: #{tpu_custom_call.1} parent=1 // pred_check_branch
      %36 = sbr.rel (0) target = $region17
    $region16: #{tpu_custom_call.1} parent=1 // pred_region
      %37 = dma.done [#allocation6], 1024
    $region17: #{tpu_custom_call.1} parent=1 // pred_fallthru
      _
    %v38 = vld [vmem:[#allocation5] sm:$0xff]
    %v39 = vld [vmem:[#allocation5 + $0x8] sm:$0xff]
    %v40 = vld [vmem:[#allocation5 + $0x10] sm:$0xff]
    %v41 = vld [vmem:[#allocation5 + $0x18] sm:$0xff]
    %v42 = vld [vmem:[#allocation5 + $0x20] sm:$0xff]
    %v43 = vld [vmem:[#allocation5 + $0x28] sm:$0xff]
    %v44 = vld [vmem:[#allocation5 + $0x30] sm:$0xff]
    %v45 = vld [vmem:[#allocation5 + $0x38] sm:$0xff]
    %v46 = vld [vmem:[#allocation2] sm:$0xff]
    %v47 = vld [vmem:[#allocation2 + $0x8] sm:$0xff]
    %v48 = vld [vmem:[#allocation2 + $0x10] sm:$0xff]
    %v49 = vld [vmem:[#allocation2 + $0x18] sm:$0xff]
    %v50 = vld [vmem:[#allocation2 + $0x20] sm:$0xff]
    %v51 = vld [vmem:[#allocation2 + $0x28] sm:$0xff]
    %v52 = vld [vmem:[#allocation2 + $0x30] sm:$0xff]
    %v53 = vld [vmem:[#allocation2 + $0x38] sm:$0xff]
    %v54 = vld [vmem:[#allocation2 + $0x40] sm:$0xff]
    %v55 = vld [vmem:[#allocation2 + $0x48] sm:$0xff]
    %v56 = vld [vmem:[#allocation2 + $0x50] sm:$0xff]
    %v57 = vld [vmem:[#allocation2 + $0x58] sm:$0xff]
    %v58 = vld [vmem:[#allocation2 + $0x60] sm:$0xff]
    %v59 = vld [vmem:[#allocation2 + $0x68] sm:$0xff]
    %v60 = vld [vmem:[#allocation2 + $0x70] sm:$0xff]
    %v61 = vld [vmem:[#allocation2 + $0x78] sm:$0xff]
    %v62 = vld [vmem:[#allocation2 + $0x80] sm:$0xff]
    %v63 = vld [vmem:[#allocation2 + $0x88] sm:$0xff]
    %v64 = vld [vmem:[#allocation2 + $0x90] sm:$0xff]
    %v65 = vld [vmem:[#allocation2 + $0x98] sm:$0xff]
    %v66 = vld [vmem:[#allocation2 + $0xa0] sm:$0xff]
    %v67 = vld [vmem:[#allocation2 + $0xa8] sm:$0xff]
    %v68 = vld [vmem:[#allocation2 + $0xb0] sm:$0xff]
    %v69 = vld [vmem:[#allocation2 + $0xb8] sm:$0xff]
    %v70 = vld [vmem:[#allocation2 + $0xc0] sm:$0xff]
    %v71 = vld [vmem:[#allocation2 + $0xc8] sm:$0xff]
    %v72 = vld [vmem:[#allocation2 + $0xd0] sm:$0xff]
    %v73 = vld [vmem:[#allocation2 + $0xd8] sm:$0xff]
    %v74 = vld [vmem:[#allocation2 + $0xe0] sm:$0xff]
    %v75 = vld [vmem:[#allocation2 + $0xe8] sm:$0xff]
    %v76 = vld [vmem:[#allocation2 + $0xf0] sm:$0xff]
    %v77 = vld [vmem:[#allocation2 + $0xf8] sm:$0xff]
    %v78 = vld [vmem:[#allocation2 + $0x100] sm:$0xff]
    %v79 = vld [vmem:[#allocation2 + $0x108] sm:$0xff]
    %v80 = vld [vmem:[#allocation2 + $0x110] sm:$0xff]
    %v81 = vld [vmem:[#allocation2 + $0x118] sm:$0xff]
    %v82 = vld [vmem:[#allocation2 + $0x120] sm:$0xff]
    %v83 = vld [vmem:[#allocation2 + $0x128] sm:$0xff]
    %v84 = vld [vmem:[#allocation2 + $0x130] sm:$0xff]
    %v85 = vld [vmem:[#allocation2 + $0x138] sm:$0xff]
    %v86 = vld [vmem:[#allocation2 + $0x140] sm:$0xff]
    %v87 = vld [vmem:[#allocation2 + $0x148] sm:$0xff]
    %v88 = vld [vmem:[#allocation2 + $0x150] sm:$0xff]
    %v89 = vld [vmem:[#allocation2 + $0x158] sm:$0xff]
    %v90 = vld [vmem:[#allocation2 + $0x160] sm:$0xff]
    %v91 = vld [vmem:[#allocation2 + $0x168] sm:$0xff]
    %v92 = vld [vmem:[#allocation2 + $0x170] sm:$0xff]
    %v93 = vld [vmem:[#allocation2 + $0x178] sm:$0xff]
    %v94 = vld [vmem:[#allocation2 + $0x180] sm:$0xff]
    %v95 = vld [vmem:[#allocation2 + $0x188] sm:$0xff]
    %v96 = vld [vmem:[#allocation2 + $0x190] sm:$0xff]
    %v97 = vld [vmem:[#allocation2 + $0x198] sm:$0xff]
    %v98 = vld [vmem:[#allocation2 + $0x1a0] sm:$0xff]
    %v99 = vld [vmem:[#allocation2 + $0x1a8] sm:$0xff]
    %v100 = vld [vmem:[#allocation2 + $0x1b0] sm:$0xff]
    %v101 = vld [vmem:[#allocation2 + $0x1b8] sm:$0xff]
    %v102 = vld [vmem:[#allocation2 + $0x1c0] sm:$0xff]
    %v103 = vld [vmem:[#allocation2 + $0x1c8] sm:$0xff]
    %v104 = vld [vmem:[#allocation2 + $0x1d0] sm:$0xff]
    %v105 = vld [vmem:[#allocation2 + $0x1d8] sm:$0xff]
    %v106 = vld [vmem:[#allocation2 + $0x1e0] sm:$0xff]
    %v107 = vld [vmem:[#allocation2 + $0x1e8] sm:$0xff]
    %v108 = vld [vmem:[#allocation2 + $0x1f0] sm:$0xff]
    %v109 = vld [vmem:[#allocation2 + $0x1f8] sm:$0xff]
    %v110 = vld [vmem:[#allocation2 + $0x200] sm:$0xff]
    %v111 = vld [vmem:[#allocation2 + $0x208] sm:$0xff]
    %v112 = vld [vmem:[#allocation2 + $0x210] sm:$0xff]
    %v113 = vld [vmem:[#allocation2 + $0x218] sm:$0xff]
    %v114 = vld [vmem:[#allocation2 + $0x220] sm:$0xff]
    %v115 = vld [vmem:[#allocation2 + $0x228] sm:$0xff]
    %v116 = vld [vmem:[#allocation2 + $0x230] sm:$0xff]
    %v117 = vld [vmem:[#allocation2 + $0x238] sm:$0xff]
    %v118 = vld [vmem:[#allocation2 + $0x240] sm:$0xff]
    %v119 = vld [vmem:[#allocation2 + $0x248] sm:$0xff]
    %v120 = vld [vmem:[#allocation2 + $0x250] sm:$0xff]
    %v121 = vld [vmem:[#allocation2 + $0x258] sm:$0xff]
    %v122 = vld [vmem:[#allocation2 + $0x260] sm:$0xff]
    %v123 = vld [vmem:[#allocation2 + $0x268] sm:$0xff]
    %v124 = vld [vmem:[#allocation2 + $0x270] sm:$0xff]
    %v125 = vld [vmem:[#allocation2 + $0x278] sm:$0xff]
    %v126 = vld [vmem:[#allocation2 + $0x280] sm:$0xff]
    %v127 = vld [vmem:[#allocation2 + $0x288] sm:$0xff]
    %v128 = vld [vmem:[#allocation2 + $0x290] sm:$0xff]
    %v129 = vld [vmem:[#allocation2 + $0x298] sm:$0xff]
    %v130 = vld [vmem:[#allocation2 + $0x2a0] sm:$0xff]
    %v131 = vld [vmem:[#allocation2 + $0x2a8] sm:$0xff]
    %v132 = vld [vmem:[#allocation2 + $0x2b0] sm:$0xff]
    %v133 = vld [vmem:[#allocation2 + $0x2b8] sm:$0xff]
    %v134 = vld [vmem:[#allocation2 + $0x2c0] sm:$0xff]
    %v135 = vld [vmem:[#allocation2 + $0x2c8] sm:$0xff]
    %v136 = vld [vmem:[#allocation2 + $0x2d0] sm:$0xff]
    %v137 = vld [vmem:[#allocation2 + $0x2d8] sm:$0xff]
    %v138 = vld [vmem:[#allocation2 + $0x2e0] sm:$0xff]
    %v139 = vld [vmem:[#allocation2 + $0x2e8] sm:$0xff]
    %v140 = vld [vmem:[#allocation2 + $0x2f0] sm:$0xff]
    %v141 = vld [vmem:[#allocation2 + $0x2f8] sm:$0xff]
    %v142 = vld [vmem:[#allocation2 + $0x300] sm:$0xff]
    %v143 = vld [vmem:[#allocation2 + $0x308] sm:$0xff]
    %v144 = vld [vmem:[#allocation2 + $0x310] sm:$0xff]
    %v145 = vld [vmem:[#allocation2 + $0x318] sm:$0xff]
    %v146 = vld [vmem:[#allocation2 + $0x320] sm:$0xff]
    %v147 = vld [vmem:[#allocation2 + $0x328] sm:$0xff]
    %v148 = vld [vmem:[#allocation2 + $0x330] sm:$0xff]
    %v149 = vld [vmem:[#allocation2 + $0x338] sm:$0xff]
    %v150 = vld [vmem:[#allocation2 + $0x340] sm:$0xff]
    %v151 = vld [vmem:[#allocation2 + $0x348] sm:$0xff]
    %v152 = vld [vmem:[#allocation2 + $0x350] sm:$0xff]
    %v153 = vld [vmem:[#allocation2 + $0x358] sm:$0xff]
    %v154 = vld [vmem:[#allocation2 + $0x360] sm:$0xff]
    %v155 = vld [vmem:[#allocation2 + $0x368] sm:$0xff]
    %v156 = vld [vmem:[#allocation2 + $0x370] sm:$0xff]
    %v157 = vld [vmem:[#allocation2 + $0x378] sm:$0xff]
    %v158 = vld [vmem:[#allocation2 + $0x380] sm:$0xff]
    %v159 = vld [vmem:[#allocation2 + $0x388] sm:$0xff]
    %v160 = vld [vmem:[#allocation2 + $0x390] sm:$0xff]
    %v161 = vld [vmem:[#allocation2 + $0x398] sm:$0xff]
    %v162 = vld [vmem:[#allocation2 + $0x3a0] sm:$0xff]
    %v163 = vld [vmem:[#allocation2 + $0x3a8] sm:$0xff]
    %v164 = vld [vmem:[#allocation2 + $0x3b0] sm:$0xff]
    %v165 = vld [vmem:[#allocation2 + $0x3b8] sm:$0xff]
    %v166 = vld [vmem:[#allocation2 + $0x3c0] sm:$0xff]
    %v167 = vld [vmem:[#allocation2 + $0x3c8] sm:$0xff]
    %v168 = vld [vmem:[#allocation2 + $0x3d0] sm:$0xff]
    %v169 = vld [vmem:[#allocation2 + $0x3d8] sm:$0xff]
    %v170 = vld [vmem:[#allocation2 + $0x3e0] sm:$0xff]
    %v171 = vld [vmem:[#allocation2 + $0x3e8] sm:$0xff]
    %v172 = vld [vmem:[#allocation2 + $0x3f0] sm:$0xff]
    %v173 = vld [vmem:[#allocation2 + $0x3f8] sm:$0xff]
    %v174 = vld [vmem:[#allocation2 + $0x400] sm:$0xff]
    %v175 = vld [vmem:[#allocation2 + $0x408] sm:$0xff]
    %v176 = vld [vmem:[#allocation2 + $0x410] sm:$0xff]
    %v177 = vld [vmem:[#allocation2 + $0x418] sm:$0xff]
    %v178 = vld [vmem:[#allocation2 + $0x420] sm:$0xff]
    %v179 = vld [vmem:[#allocation2 + $0x428] sm:$0xff]
    %v180 = vld [vmem:[#allocation2 + $0x430] sm:$0xff]
    %v181 = vld [vmem:[#allocation2 + $0x438] sm:$0xff]
    %v182 = vld [vmem:[#allocation2 + $0x440] sm:$0xff]
    %v183 = vld [vmem:[#allocation2 + $0x448] sm:$0xff]
    %v184 = vld [vmem:[#allocation2 + $0x450] sm:$0xff]
    %v185 = vld [vmem:[#allocation2 + $0x458] sm:$0xff]
    %v186 = vld [vmem:[#allocation2 + $0x460] sm:$0xff]
    %v187 = vld [vmem:[#allocation2 + $0x468] sm:$0xff]
    %v188 = vld [vmem:[#allocation2 + $0x470] sm:$0xff]
    %v189 = vld [vmem:[#allocation2 + $0x478] sm:$0xff]
    %v190 = vld [vmem:[#allocation2 + $0x480] sm:$0xff]
    %v191 = vld [vmem:[#allocation2 + $0x488] sm:$0xff]
    %v192 = vld [vmem:[#allocation2 + $0x490] sm:$0xff]
    %v193 = vld [vmem:[#allocation2 + $0x498] sm:$0xff]
    %v194 = vld [vmem:[#allocation2 + $0x4a0] sm:$0xff]
    %v195 = vld [vmem:[#allocation2 + $0x4a8] sm:$0xff]
    %v196 = vld [vmem:[#allocation2 + $0x4b0] sm:$0xff]
    %v197 = vld [vmem:[#allocation2 + $0x4b8] sm:$0xff]
    %v198 = vld [vmem:[#allocation2 + $0x4c0] sm:$0xff]
    %v199 = vld [vmem:[#allocation2 + $0x4c8] sm:$0xff]
    %v200 = vld [vmem:[#allocation2 + $0x4d0] sm:$0xff]
    %v201 = vld [vmem:[#allocation2 + $0x4d8] sm:$0xff]
    %v202 = vld [vmem:[#allocation2 + $0x4e0] sm:$0xff]
    %v203 = vld [vmem:[#allocation2 + $0x4e8] sm:$0xff]
    %v204 = vld [vmem:[#allocation2 + $0x4f0] sm:$0xff]
    %v205 = vld [vmem:[#allocation2 + $0x4f8] sm:$0xff]
    %v206 = vld [vmem:[#allocation2 + $0x500] sm:$0xff]
    %v207 = vld [vmem:[#allocation2 + $0x508] sm:$0xff]
    %v208 = vld [vmem:[#allocation2 + $0x510] sm:$0xff]
    %v209 = vld [vmem:[#allocation2 + $0x518] sm:$0xff]
    %v210 = vld [vmem:[#allocation2 + $0x520] sm:$0xff]
    %v211 = vld [vmem:[#allocation2 + $0x528] sm:$0xff]
    %v212 = vld [vmem:[#allocation2 + $0x530] sm:$0xff]
    %v213 = vld [vmem:[#allocation2 + $0x538] sm:$0xff]
    %v214 = vld [vmem:[#allocation2 + $0x540] sm:$0xff]
    %v215 = vld [vmem:[#allocation2 + $0x548] sm:$0xff]
    %v216 = vld [vmem:[#allocation2 + $0x550] sm:$0xff]
    %v217 = vld [vmem:[#allocation2 + $0x558] sm:$0xff]
    %v218 = vld [vmem:[#allocation2 + $0x560] sm:$0xff]
    %v219 = vld [vmem:[#allocation2 + $0x568] sm:$0xff]
    %v220 = vld [vmem:[#allocation2 + $0x570] sm:$0xff]
    %v221 = vld [vmem:[#allocation2 + $0x578] sm:$0xff]
    %v222 = vld [vmem:[#allocation2 + $0x580] sm:$0xff]
    %v223 = vld [vmem:[#allocation2 + $0x588] sm:$0xff]
    %v224 = vld [vmem:[#allocation2 + $0x590] sm:$0xff]
    %v225 = vld [vmem:[#allocation2 + $0x598] sm:$0xff]
    %v226 = vld [vmem:[#allocation2 + $0x5a0] sm:$0xff]
    %v227 = vld [vmem:[#allocation2 + $0x5a8] sm:$0xff]
    %v228 = vld [vmem:[#allocation2 + $0x5b0] sm:$0xff]
    %v229 = vld [vmem:[#allocation2 + $0x5b8] sm:$0xff]
    %v230 = vld [vmem:[#allocation2 + $0x5c0] sm:$0xff]
    %v231 = vld [vmem:[#allocation2 + $0x5c8] sm:$0xff]
    %v232 = vld [vmem:[#allocation2 + $0x5d0] sm:$0xff]
    %v233 = vld [vmem:[#allocation2 + $0x5d8] sm:$0xff]
    %v234 = vld [vmem:[#allocation2 + $0x5e0] sm:$0xff]
    %v235 = vld [vmem:[#allocation2 + $0x5e8] sm:$0xff]
    %v236 = vld [vmem:[#allocation2 + $0x5f0] sm:$0xff]
    %v237 = vld [vmem:[#allocation2 + $0x5f8] sm:$0xff]
    %v238 = vld [vmem:[#allocation2 + $0x600] sm:$0xff]
    %v239 = vld [vmem:[#allocation2 + $0x608] sm:$0xff]
    %v240 = vld [vmem:[#allocation2 + $0x610] sm:$0xff]
    %v241 = vld [vmem:[#allocation2 + $0x618] sm:$0xff]
    %v242 = vld [vmem:[#allocation2 + $0x620] sm:$0xff]
    %v243 = vld [vmem:[#allocation2 + $0x628] sm:$0xff]
    %v244 = vld [vmem:[#allocation2 + $0x630] sm:$0xff]
    %v245 = vld [vmem:[#allocation2 + $0x638] sm:$0xff]
    %v246 = vld [vmem:[#allocation2 + $0x640] sm:$0xff]
    %v247 = vld [vmem:[#allocation2 + $0x648] sm:$0xff]
    %v248 = vld [vmem:[#allocation2 + $0x650] sm:$0xff]
    %v249 = vld [vmem:[#allocation2 + $0x658] sm:$0xff]
    %v250 = vld [vmem:[#allocation2 + $0x660] sm:$0xff]
    %v251 = vld [vmem:[#allocation2 + $0x668] sm:$0xff]
    %v252 = vld [vmem:[#allocation2 + $0x670] sm:$0xff]
    %v253 = vld [vmem:[#allocation2 + $0x678] sm:$0xff]
    %v254 = vld [vmem:[#allocation2 + $0x680] sm:$0xff]
    %v255 = vld [vmem:[#allocation2 + $0x688] sm:$0xff]
    %v256 = vld [vmem:[#allocation2 + $0x690] sm:$0xff]
    %v257 = vld [vmem:[#allocation2 + $0x698] sm:$0xff]
    %v258 = vld [vmem:[#allocation2 + $0x6a0] sm:$0xff]
    %v259 = vld [vmem:[#allocation2 + $0x6a8] sm:$0xff]
    %v260 = vld [vmem:[#allocation2 + $0x6b0] sm:$0xff]
    %v261 = vld [vmem:[#allocation2 + $0x6b8] sm:$0xff]
    %v262 = vld [vmem:[#allocation2 + $0x6c0] sm:$0xff]
    %v263 = vld [vmem:[#allocation2 + $0x6c8] sm:$0xff]
    %v264 = vld [vmem:[#allocation2 + $0x6d0] sm:$0xff]
    %v265 = vld [vmem:[#allocation2 + $0x6d8] sm:$0xff]
    %v266 = vld [vmem:[#allocation2 + $0x6e0] sm:$0xff]
    %v267 = vld [vmem:[#allocation2 + $0x6e8] sm:$0xff]
    %v268 = vld [vmem:[#allocation2 + $0x6f0] sm:$0xff]
    %v269 = vld [vmem:[#allocation2 + $0x6f8] sm:$0xff]
    %v270 = vld [vmem:[#allocation2 + $0x700] sm:$0xff]
    %v271 = vld [vmem:[#allocation2 + $0x708] sm:$0xff]
    %v272 = vld [vmem:[#allocation2 + $0x710] sm:$0xff]
    %v273 = vld [vmem:[#allocation2 + $0x718] sm:$0xff]
    %v274 = vld [vmem:[#allocation2 + $0x720] sm:$0xff]
    %v275 = vld [vmem:[#allocation2 + $0x728] sm:$0xff]
    %v276 = vld [vmem:[#allocation2 + $0x730] sm:$0xff]
    %v277 = vld [vmem:[#allocation2 + $0x738] sm:$0xff]
    %v278 = vld [vmem:[#allocation2 + $0x740] sm:$0xff]
    %v279 = vld [vmem:[#allocation2 + $0x748] sm:$0xff]
    %v280 = vld [vmem:[#allocation2 + $0x750] sm:$0xff]
    %v281 = vld [vmem:[#allocation2 + $0x758] sm:$0xff]
    %v282 = vld [vmem:[#allocation2 + $0x760] sm:$0xff]
    %v283 = vld [vmem:[#allocation2 + $0x768] sm:$0xff]
    %v284 = vld [vmem:[#allocation2 + $0x770] sm:$0xff]
    %v285 = vld [vmem:[#allocation2 + $0x778] sm:$0xff]
    %v286 = vld [vmem:[#allocation2 + $0x780] sm:$0xff]
    %v287 = vld [vmem:[#allocation2 + $0x788] sm:$0xff]
    %v288 = vld [vmem:[#allocation2 + $0x790] sm:$0xff]
    %v289 = vld [vmem:[#allocation2 + $0x798] sm:$0xff]
    %v290 = vld [vmem:[#allocation2 + $0x7a0] sm:$0xff]
    %v291 = vld [vmem:[#allocation2 + $0x7a8] sm:$0xff]
    %v292 = vld [vmem:[#allocation2 + $0x7b0] sm:$0xff]
    %v293 = vld [vmem:[#allocation2 + $0x7b8] sm:$0xff]
    %v294 = vld [vmem:[#allocation2 + $0x7c0] sm:$0xff]
    %v295 = vld [vmem:[#allocation2 + $0x7c8] sm:$0xff]
    %v296 = vld [vmem:[#allocation2 + $0x7d0] sm:$0xff]
    %v297 = vld [vmem:[#allocation2 + $0x7d8] sm:$0xff]
    %v298 = vld [vmem:[#allocation2 + $0x7e0] sm:$0xff]
    %v299 = vld [vmem:[#allocation2 + $0x7e8] sm:$0xff]
    %v300 = vld [vmem:[#allocation2 + $0x7f0] sm:$0xff]
    %v301 = vld [vmem:[#allocation2 + $0x7f8] sm:$0xff]
    %302 = vmatprep.subr.mxu0 %v47
    %303 = vmatpush1.msra.mxu0 %v46
    %304 = vmatprep.subr.mxu0 %v49
    %305 = vmatpush1.msra.mxu0 %v48
    %306 = vmatprep.subr.mxu0 %v51
    %307 = vmatpush1.msra.mxu0 %v50
    %308 = vmatprep.subr.mxu0 %v53
    %309 = vmatpush1.msra.mxu0 %v52
    %310 = vmatprep.subr.mxu0 %v55
    %311 = vmatpush1.msra.mxu0 %v54
    %312 = vmatprep.subr.mxu0 %v57
    %313 = vmatpush1.msra.mxu0 %v56
    %314 = vmatprep.subr.mxu0 %v59
    %315 = vmatpush1.msra.mxu0 %v58
    %316 = vmatprep.subr.mxu0 %v61
    %317 = vmatpush1.msra.mxu0 %v60
    %318 = vmatprep.subr.mxu0 %v63
    %319 = vmatpush1.msra.mxu0 %v62
    %320 = vmatprep.subr.mxu0 %v65
    %321 = vmatpush1.msra.mxu0 %v64
    %322 = vmatprep.subr.mxu0 %v67
    %323 = vmatpush1.msra.mxu0 %v66
    %324 = vmatprep.subr.mxu0 %v69
    %325 = vmatpush1.msra.mxu0 %v68
    %326 = vmatprep.subr.mxu0 %v71
    %327 = vmatpush1.msra.mxu0 %v70
    %328 = vmatprep.subr.mxu0 %v73
    %329 = vmatpush1.msra.mxu0 %v72
    %330 = vmatprep.subr.mxu0 %v75
    %331 = vmatpush1.msra.mxu0 %v74
    %332 = vmatprep.subr.mxu0 %v77
    %333 = vmatpush1.msra.mxu0 %v76
    %334 = vmatprep.subr.mxu0 %v79
    %335 = vmatpush1.msra.mxu0 %v78
    %336 = vmatprep.subr.mxu0 %v81
    %337 = vmatpush1.msra.mxu0 %v80
    %338 = vmatprep.subr.mxu0 %v83
    %339 = vmatpush1.msra.mxu0 %v82
    %340 = vmatprep.subr.mxu0 %v85
    %341 = vmatpush1.msra.mxu0 %v84
    %342 = vmatprep.subr.mxu0 %v87
    %343 = vmatpush1.msra.mxu0 %v86
    %344 = vmatprep.subr.mxu0 %v89
    %345 = vmatpush1.msra.mxu0 %v88
    %346 = vmatprep.subr.mxu0 %v91
    %347 = vmatpush1.msra.mxu0 %v90
    %348 = vmatprep.subr.mxu0 %v93
    %349 = vmatpush1.msra.mxu0 %v92
    %350 = vmatprep.subr.mxu0 %v95
    %351 = vmatpush1.msra.mxu0 %v94
    %352 = vmatprep.subr.mxu0 %v97
    %353 = vmatpush1.msra.mxu0 %v96
    %354 = vmatprep.subr.mxu0 %v99
    %355 = vmatpush1.msra.mxu0 %v98
    %356 = vmatprep.subr.mxu0 %v101
    %357 = vmatpush1.msra.mxu0 %v100
    %358 = vmatprep.subr.mxu0 %v103
    %359 = vmatpush1.msra.mxu0 %v102
    %360 = vmatprep.subr.mxu0 %v105
    %361 = vmatpush1.msra.mxu0 %v104
    %362 = vmatprep.subr.mxu0 %v107
    %363 = vmatpush1.msra.mxu0 %v106
    %364 = vmatprep.subr.mxu0 %v109
    %365 = vmatpush1.msra.mxu0 %v108
    %366 = vmatprep.mubr.f32.mxu0 %v39
    %367 = vmatmul.mubr.f32.gmra.mrb[0].mxu0 %v38
    %v368 = vpop.f32.mrb[0].mxu0
    %v369 = vadd.f32 0.0, %v368
    %v370 = vpop.f32.mrb[0].mxu0
    %v371 = vadd.f32 0.0, %v370
    %372 = vdwg.mxu0
    %373 = vmatprep.subr.mxu0 %v111
    %374 = vmatpush1.msra.mxu0 %v110
    %375 = vmatprep.subr.mxu0 %v113
    %376 = vmatpush1.msra.mxu0 %v112
    %377 = vmatprep.subr.mxu0 %v115
    %378 = vmatpush1.msra.mxu0 %v114
    %379 = vmatprep.subr.mxu0 %v117
    %380 = vmatpush1.msra.mxu0 %v116
    %381 = vmatprep.subr.mxu0 %v119
    %382 = vmatpush1.msra.mxu0 %v118
    %383 = vmatprep.subr.mxu0 %v121
    %384 = vmatpush1.msra.mxu0 %v120
    %385 = vmatprep.subr.mxu0 %v123
    %386 = vmatpush1.msra.mxu0 %v122
    %387 = vmatprep.subr.mxu0 %v125
    %388 = vmatpush1.msra.mxu0 %v124
    %389 = vmatprep.subr.mxu0 %v127
    %390 = vmatpush1.msra.mxu0 %v126
    %391 = vmatprep.subr.mxu0 %v129
    %392 = vmatpush1.msra.mxu0 %v128
    %393 = vmatprep.subr.mxu0 %v131
    %394 = vmatpush1.msra.mxu0 %v130
    %395 = vmatprep.subr.mxu0 %v133
    %396 = vmatpush1.msra.mxu0 %v132
    %397 = vmatprep.subr.mxu0 %v135
    %398 = vmatpush1.msra.mxu0 %v134
    %399 = vmatprep.subr.mxu0 %v137
    %400 = vmatpush1.msra.mxu0 %v136
    %401 = vmatprep.subr.mxu0 %v139
    %402 = vmatpush1.msra.mxu0 %v138
    %403 = vmatprep.subr.mxu0 %v141
    %404 = vmatpush1.msra.mxu0 %v140
    %405 = vmatprep.subr.mxu0 %v143
    %406 = vmatpush1.msra.mxu0 %v142
    %407 = vmatprep.subr.mxu0 %v145
    %408 = vmatpush1.msra.mxu0 %v144
    %409 = vmatprep.subr.mxu0 %v147
    %410 = vmatpush1.msra.mxu0 %v146
    %411 = vmatprep.subr.mxu0 %v149
    %412 = vmatpush1.msra.mxu0 %v148
    %413 = vmatprep.subr.mxu0 %v151
    %414 = vmatpush1.msra.mxu0 %v150
    %415 = vmatprep.subr.mxu0 %v153
    %416 = vmatpush1.msra.mxu0 %v152
    %417 = vmatprep.subr.mxu0 %v155
    %418 = vmatpush1.msra.mxu0 %v154
    %419 = vmatprep.subr.mxu0 %v157
    %420 = vmatpush1.msra.mxu0 %v156
    %421 = vmatprep.subr.mxu0 %v159
    %422 = vmatpush1.msra.mxu0 %v158
    %423 = vmatprep.subr.mxu0 %v161
    %424 = vmatpush1.msra.mxu0 %v160
    %425 = vmatprep.subr.mxu0 %v163
    %426 = vmatpush1.msra.mxu0 %v162
    %427 = vmatprep.subr.mxu0 %v165
    %428 = vmatpush1.msra.mxu0 %v164
    %429 = vmatprep.subr.mxu0 %v167
    %430 = vmatpush1.msra.mxu0 %v166
    %431 = vmatprep.subr.mxu0 %v169
    %432 = vmatpush1.msra.mxu0 %v168
    %433 = vmatprep.subr.mxu0 %v171
    %434 = vmatpush1.msra.mxu0 %v170
    %435 = vmatprep.subr.mxu0 %v173
    %436 = vmatpush1.msra.mxu0 %v172
    %437 = vmatprep.mubr.f32.mxu0 %v41
    %438 = vmatmul.mubr.f32.gmra.mrb[0].mxu0 %v40
    %v439 = vpop.f32.mrb[0].mxu0
    %v440 = vadd.f32 %v369, %v439
    %v441 = vpop.f32.mrb[0].mxu0
    %v442 = vadd.f32 %v371, %v441
    %443 = vdwg.mxu0
    %444 = vmatprep.subr.mxu0 %v175
    %445 = vmatpush1.msra.mxu0 %v174
    %446 = vmatprep.subr.mxu0 %v177
    %447 = vmatpush1.msra.mxu0 %v176
    %448 = vmatprep.subr.mxu0 %v179
    %449 = vmatpush1.msra.mxu0 %v178
    %450 = vmatprep.subr.mxu0 %v181
    %451 = vmatpush1.msra.mxu0 %v180
    %452 = vmatprep.subr.mxu0 %v183
    %453 = vmatpush1.msra.mxu0 %v182
    %454 = vmatprep.subr.mxu0 %v185
    %455 = vmatpush1.msra.mxu0 %v184
    %456 = vmatprep.subr.mxu0 %v187
    %457 = vmatpush1.msra.mxu0 %v186
    %458 = vmatprep.subr.mxu0 %v189
    %459 = vmatpush1.msra.mxu0 %v188
    %460 = vmatprep.subr.mxu0 %v191
    %461 = vmatpush1.msra.mxu0 %v190
    %462 = vmatprep.subr.mxu0 %v193
    %463 = vmatpush1.msra.mxu0 %v192
    %464 = vmatprep.subr.mxu0 %v195
    %465 = vmatpush1.msra.mxu0 %v194
    %466 = vmatprep.subr.mxu0 %v197
    %467 = vmatpush1.msra.mxu0 %v196
    %468 = vmatprep.subr.mxu0 %v199
    %469 = vmatpush1.msra.mxu0 %v198
    %470 = vmatprep.subr.mxu0 %v201
    %471 = vmatpush1.msra.mxu0 %v200
    %472 = vmatprep.subr.mxu0 %v203
    %473 = vmatpush1.msra.mxu0 %v202
    %474 = vmatprep.subr.mxu0 %v205
    %475 = vmatpush1.msra.mxu0 %v204
    %476 = vmatprep.subr.mxu0 %v207
    %477 = vmatpush1.msra.mxu0 %v206
    %478 = vmatprep.subr.mxu0 %v209
    %479 = vmatpush1.msra.mxu0 %v208
    %480 = vmatprep.subr.mxu0 %v211
    %481 = vmatpush1.msra.mxu0 %v210
    %482 = vmatprep.subr.mxu0 %v213
    %483 = vmatpush1.msra.mxu0 %v212
    %484 = vmatprep.subr.mxu0 %v215
    %485 = vmatpush1.msra.mxu0 %v214
    %486 = vmatprep.subr.mxu0 %v217
    %487 = vmatpush1.msra.mxu0 %v216
    %488 = vmatprep.subr.mxu0 %v219
    %489 = vmatpush1.msra.mxu0 %v218
    %490 = vmatprep.subr.mxu0 %v221
    %491 = vmatpush1.msra.mxu0 %v220
    %492 = vmatprep.subr.mxu0 %v223
    %493 = vmatpush1.msra.mxu0 %v222
    %494 = vmatprep.subr.mxu0 %v225
    %495 = vmatpush1.msra.mxu0 %v224
    %496 = vmatprep.subr.mxu0 %v227
    %497 = vmatpush1.msra.mxu0 %v226
    %498 = vmatprep.subr.mxu0 %v229
    %499 = vmatpush1.msra.mxu0 %v228
    %500 = vmatprep.subr.mxu0 %v231
    %501 = vmatpush1.msra.mxu0 %v230
    %502 = vmatprep.subr.mxu0 %v233
    %503 = vmatpush1.msra.mxu0 %v232
    %504 = vmatprep.subr.mxu0 %v235
    %505 = vmatpush1.msra.mxu0 %v234
    %506 = vmatprep.subr.mxu0 %v237
    %507 = vmatpush1.msra.mxu0 %v236
    %508 = vmatprep.mubr.f32.mxu0 %v43
    %509 = vmatmul.mubr.f32.gmra.mrb[0].mxu0 %v42
    %v510 = vpop.f32.mrb[0].mxu0
    %v511 = vadd.f32 %v440, %v510
    %v512 = vpop.f32.mrb[0].mxu0
    %v513 = vadd.f32 %v442, %v512
    %514 = vdwg.mxu0
    %515 = vmatprep.subr.mxu0 %v239
    %516 = vmatpush1.msra.mxu0 %v238
    %517 = vmatprep.subr.mxu0 %v241
    %518 = vmatpush1.msra.mxu0 %v240
    %519 = vmatprep.subr.mxu0 %v243
    %520 = vmatpush1.msra.mxu0 %v242
    %521 = vmatprep.subr.mxu0 %v245
    %522 = vmatpush1.msra.mxu0 %v244
    %523 = vmatprep.subr.mxu0 %v247
    %524 = vmatpush1.msra.mxu0 %v246
    %525 = vmatprep.subr.mxu0 %v249
    %526 = vmatpush1.msra.mxu0 %v248
    %527 = vmatprep.subr.mxu0 %v251
    %528 = vmatpush1.msra.mxu0 %v250
    %529 = vmatprep.subr.mxu0 %v253
    %530 = vmatpush1.msra.mxu0 %v252
    %531 = vmatprep.subr.mxu0 %v255
    %532 = vmatpush1.msra.mxu0 %v254
    %533 = vmatprep.subr.mxu0 %v257
    %534 = vmatpush1.msra.mxu0 %v256
    %535 = vmatprep.subr.mxu0 %v259
    %536 = vmatpush1.msra.mxu0 %v258
    %537 = vmatprep.subr.mxu0 %v261
    %538 = vmatpush1.msra.mxu0 %v260
    %539 = vmatprep.subr.mxu0 %v263
    %540 = vmatpush1.msra.mxu0 %v262
    %541 = vmatprep.subr.mxu0 %v265
    %542 = vmatpush1.msra.mxu0 %v264
    %543 = vmatprep.subr.mxu0 %v267
    %544 = vmatpush1.msra.mxu0 %v266
    %545 = vmatprep.subr.mxu0 %v269
    %546 = vmatpush1.msra.mxu0 %v268
    %547 = vmatprep.subr.mxu0 %v271
    %548 = vmatpush1.msra.mxu0 %v270
    %549 = vmatprep.subr.mxu0 %v273
    %550 = vmatpush1.msra.mxu0 %v272
    %551 = vmatprep.subr.mxu0 %v275
    %552 = vmatpush1.msra.mxu0 %v274
    %553 = vmatprep.subr.mxu0 %v277
    %554 = vmatpush1.msra.mxu0 %v276
    %555 = vmatprep.subr.mxu0 %v279
    %556 = vmatpush1.msra.mxu0 %v278
    %557 = vmatprep.subr.mxu0 %v281
    %558 = vmatpush1.msra.mxu0 %v280
    %559 = vmatprep.subr.mxu0 %v283
    %560 = vmatpush1.msra.mxu0 %v282
    %561 = vmatprep.subr.mxu0 %v285
    %562 = vmatpush1.msra.mxu0 %v284
    %563 = vmatprep.subr.mxu0 %v287
    %564 = vmatpush1.msra.mxu0 %v286
    %565 = vmatprep.subr.mxu0 %v289
    %566 = vmatpush1.msra.mxu0 %v288
    %567 = vmatprep.subr.mxu0 %v291
    %568 = vmatpush1.msra.mxu0 %v290
    %569 = vmatprep.subr.mxu0 %v293
    %570 = vmatpush1.msra.mxu0 %v292
    %571 = vmatprep.subr.mxu0 %v295
    %572 = vmatpush1.msra.mxu0 %v294
    %573 = vmatprep.subr.mxu0 %v297
    %574 = vmatpush1.msra.mxu0 %v296
    %575 = vmatprep.subr.mxu0 %v299
    %576 = vmatpush1.msra.mxu0 %v298
    %577 = vmatprep.subr.mxu0 %v301
    %578 = vmatpush1.msra.mxu0 %v300
    %579 = vmatprep.mubr.f32.mxu0 %v45
    %580 = vmatmul.mubr.f32.gmra.mrb[0].mxu0 %v44
    %v581 = vpop.f32.mrb[0].mxu0
    %v582 = vadd.f32 %v511, %v581
    %v583 = vpop.f32.mrb[0].mxu0
    %v584 = vadd.f32 %v513, %v583
    %585 = vdwg.mxu0
    %586 = vst [vmem:[#allocation7] sm:$0xff] %v582
    %587 = vst [vmem:[#allocation7 + $0x8] sm:$0xff] %v584
    // Predicated region
    $region18: #{tpu_custom_call.1} parent=1 // pred_check
      _
    $region19: #{tpu_custom_call.1} parent=1 // pred_check_branch
      %589 = sbr.rel (0) target = $region21
    $region20: #{tpu_custom_call.1} parent=1 // pred_region
      %s591 = ssub.s32 256, 256
      %592 = vsyncadd [#allocation4], %s591
      %s594 = sshll.u32 [#allocation7], 4
      %s595 = int_to_ptr.vmem [resolvable:$true] %s594
      %597 = dma.vmem_to_hbm [thread:$0]  %s595, 256, %s2, [#allocation4]
    $region21: #{tpu_custom_call.1} parent=1 // pred_fallthru
      _
    // Predicated region
    $region22: #{tpu_custom_call.1} parent=1 // pred_check
      _
    $region23: #{tpu_custom_call.1} parent=1 // pred_check_branch
      %599 = sbr.rel (0) target = $region25
    $region24: #{tpu_custom_call.1} parent=1 // pred_region
      %600 = dma.done [#allocation4], 256
    $region25: #{tpu_custom_call.1} parent=1 // pred_fallthru
      _
    %601 = vsyncpa [#allocation3], 1
    %602 = vsyncpa [#allocation6], 1
    %603 = vsyncpa [#allocation4], 1

</llo_original>
